<compile_context>
chip_gen: v6e
topology: v6e:2x2x1
jax: 0.10.0
libtpu: 0.0.40
codegen_flags: <defaults>
</compile_context>

<pallas_src>
import functools

import jax
import jax.numpy as jnp
from jax.experimental import pallas as pl
from jax.experimental.pallas import tpu as pltpu


def lren_fused_kernel(x_ref, gamma_ref, beta_ref, w0_ref, b0_ref, w1_ref,
                      scale_ref, wkT_ref, ytarg_ref, ypred_ref, y0_sc,
                      *, n_shifts):
    """Fused LREN forward.

    x_ref     : (N, T_total, D)  full input; only the first n_shifts steps are used
    gamma/beta: (1, D)           BatchNorm1d affine params
    w0        : (D, H), b0: (1, H)   Linear(D, H) (weight pre-transposed for x @ W)
    w1        : (H, K)           Linear(H, K, bias=False)
    scale     : (1, K)           Encoder.output_scale
    wkT       : (M, M)           Koopman weight, already transposed (x @ W^T convention)
    ytarg_ref : (N, n_shifts-1, M)   output y[:, 1:, :]
    ypred_ref : (N, n_shifts-1, M)   output Koopman rollout
    y0_sc     : (N, M) VMEM scratch for y[:, 0, :]
    """
    N, _, D = x_ref.shape
    T = n_shifts
    n_steps = T - 1

    # Static per-batch slices of the first n_shifts time steps (slice absorbed in-kernel).
    xs = [x_ref[n, 0:T, :] for n in range(N)]                    # each (T, D)

    # nn.BatchNorm1d(D) in its default training mode: biased batch statistics over
    # all N*T rows of the (sliced) input, eps = 1e-5, affine gamma/beta.
    inv_cnt = 1.0 / float(N * T)
    mean = sum(jnp.sum(x, axis=0, keepdims=True) for x in xs) * inv_cnt          # (1, D)
    var = sum(jnp.sum(jnp.square(x - mean), axis=0, keepdims=True) for x in xs) * inv_cnt
    inv_std = jax.lax.rsqrt(var + 1e-5)

    gamma = gamma_ref[...]
    beta = beta_ref[...]
    w0 = w0_ref[...]
    b0 = b0_ref[...]
    w1 = w1_ref[...]
    scale = scale_ref[...]

    for n in range(N):                                            # N is tiny & static
        xb = (xs[n] - mean) * inv_std * gamma + beta              # (T, D)
        # aux_layers[0]: Linear(D, H, bias=True) -> leaky_relu (slope 0.01)
        h = jnp.dot(xb, w0, preferred_element_type=jnp.float32) + b0   # (T, H)
        h = jnp.where(h > 0, h, 0.01 * h)
        # aux_layers[1]: Linear(H, K, bias=False) -> Dropout(p=0.0) == identity
        g = jnp.dot(h, w1, preferred_element_type=jnp.float32) * scale  # (T, K)

        # y = cat(x, enc(x)) along the feature axis, written as two direct sub-slice
        # stores in the final output layout (no concatenated value materialized).
        ytarg_ref[n, :, :D] = xs[n][1:, :]                        # (T-1, D)
        ytarg_ref[n, :, D:] = g[1:, :]                            # (T-1, K)
        y0_sc[n:n + 1, :D] = xs[n][0:1, :]                        # y[:, 0, :D]
        y0_sc[n:n + 1, D:] = g[0:1, :]                            # y[:, 0, D:]

    # Koopman recurrence: y_{i+1} = y_i @ K^T (K^T pre-transposed at param build time).
    # n_steps is static, so the loop unrolls and the 32x32 RHS stays VMEM/MXU-resident.
    wkT = wkT_ref[...]
    y1 = y0_sc[...]
    for i in range(n_steps):
        y1 = jnp.dot(y1, wkT, preferred_element_type=jnp.float32)
        for n in range(N):
            ypred_ref[n, i:i + 1, :] = y1[n:n + 1, :]


def lren_forward(x, p, n_shifts):
    """Returns (y_targ, y_pred) exactly as LREN.forward (return_ko=False)."""
    assert n_shifts > 1, "expected n_shifts>1"
    assert x.shape[1] >= n_shifts
    N, _, D = x.shape
    K = p["w1"].shape[-1]
    M = D + K
    assert p["koopman_wT"].shape == (M, M)

    vmem = pl.BlockSpec(memory_space=pltpu.MemorySpace.VMEM)
    y_targ, y_pred = pl.pallas_call(
        functools.partial(lren_fused_kernel, n_shifts=n_shifts),
        out_shape=(jax.ShapeDtypeStruct((N, n_shifts - 1, M), jnp.float32),
                   jax.ShapeDtypeStruct((N, n_shifts - 1, M), jnp.float32)),
        in_specs=[vmem] * 8,
        out_specs=(vmem, vmem),
        scratch_shapes=[pltpu.VMEM((N, M), jnp.float32)],
    )(x, p["bn_gamma"], p["bn_beta"], p["w0"], p["b0"], p["w1"],
      p["out_scale"], p["koopman_wT"])
    return y_targ, y_pred


def lren_reference(x, p, n_shifts):
    """Pure-jnp reference mirroring the PyTorch forward, for a sanity check."""
    x = x[:, :n_shifts, :]
    N, T, D = x.shape
    xf = x.reshape(N * T, D)
    mean = xf.mean(0, keepdims=True)
    var = ((xf - mean) ** 2).mean(0, keepdims=True)
    xb = (xf - mean) / jnp.sqrt(var + 1e-5) * p["bn_gamma"] + p["bn_beta"]
    h = xb @ p["w0"] + p["b0"]
    h = jnp.where(h > 0, h, 0.01 * h)
    g = (h @ p["w1"]) * p["out_scale"]
    y = jnp.concatenate([xf, g], -1).reshape(N, T, -1)
    y_targ = y[:, 1:, :]
    wT = p["koopman_wT"]
    y1 = y[:, 0, :]
    preds = []
    for _ in range(T - 1):
        y1 = y1 @ wT
        preds.append(y1)
    return y_targ, jnp.stack(preds, axis=1)


if __name__ == "__main__":
    # enc_x_shape = [D, H, K] = [8, 32, 24]; n_shifts = 6; M = D + K = 32
    N, T_total, D, H, K = 2, 10, 8, 32, 24
    n_shifts = 6
    M = D + K

    key = jax.random.PRNGKey(0)
    ks = jax.random.split(key, 6)

    def uinit(k, shape, fan_in):
        # deterministic, torch-Linear-style U(-1/sqrt(fan_in), 1/sqrt(fan_in))
        bound = 1.0 / (fan_in ** 0.5)
        return jax.random.uniform(k, shape, jnp.float32, -bound, bound)

    # TODO(synk): RBF branch (use_rbf=True), Dropout with p>0, and BatchNorm eval-mode
    # running statistics are config-off defaults; only the default training-mode path
    # is implemented (batch statistics, biased variance).
    koopman_w = uinit(ks[3], (M, M), M)               # nn.Linear(M, M, bias=False).weight
    params = {
        "bn_gamma": jnp.ones((1, D), jnp.float32),    # BatchNorm1d weight
        "bn_beta": jnp.zeros((1, D), jnp.float32),    # BatchNorm1d bias
        "w0": uinit(ks[0], (D, H), D),                # Linear(D, H) weight (pre-transposed)
        "b0": uinit(ks[1], (1, H), D),                # Linear(D, H) bias
        "w1": uinit(ks[2], (H, K), H),                # Linear(H, K, bias=False)
        "out_scale": jnp.ones((1, K), jnp.float32),   # Encoder.output_scale
        "koopman_wT": koopman_w.T,                    # pre-transposed once at param build
    }

    x = jax.random.normal(ks[4], (N, T_total, D), jnp.float32)

    y_targ, y_pred = jax.jit(lren_forward, static_argnums=2)(x, params, n_shifts)
    jax.block_until_ready((y_targ, y_pred))

    yt_ref, yp_ref = lren_reference(x, params, n_shifts)
    assert y_targ.shape == (N, n_shifts - 1, M)
    assert y_pred.shape == (N, n_shifts - 1, M)
    assert jnp.allclose(y_targ, yt_ref, atol=1e-4, rtol=1e-4)
    assert jnp.allclose(y_pred, yp_ref, atol=1e-4, rtol=1e-4)

    print("KERNEL_OK")
</pallas_src>

<mosaic_0001>
module attributes {stable_mosaic.version = 11 : i64} {
  func.func @lren_fused_kernel(%arg0: memref<2x10x8xf32, #tpu.memory_space<vmem>>, %arg1: memref<1x8xf32, #tpu.memory_space<vmem>>, %arg2: memref<1x8xf32, #tpu.memory_space<vmem>>, %arg3: memref<8x32xf32, #tpu.memory_space<vmem>>, %arg4: memref<1x32xf32, #tpu.memory_space<vmem>>, %arg5: memref<32x24xf32, #tpu.memory_space<vmem>>, %arg6: memref<1x24xf32, #tpu.memory_space<vmem>>, %arg7: memref<32x32xf32, #tpu.memory_space<vmem>>, %arg8: memref<2x5x32xf32, #tpu.memory_space<vmem>>, %arg9: memref<2x5x32xf32, #tpu.memory_space<vmem>>, %arg10: memref<2x32xf32, #tpu.memory_space<vmem>>) attributes {dimension_semantics = [], scalar_prefetch = 0 : i64, scratch_operands = 1 : i64, tpu.core_type = #tpu.core_type<tc>} {
    %c0 = arith.constant 0 : index
    %c0_0 = arith.constant 0 : index
    %c0_1 = arith.constant 0 : index
    %0 = vector.load %arg0[%c0, %c0_0, %c0_1] : memref<2x10x8xf32, #tpu.memory_space<vmem>>, vector<1x6x8xf32>
    %1 = vector.shape_cast %0 : vector<1x6x8xf32> to vector<6x8xf32>
    %c1 = arith.constant 1 : index
    %c0_2 = arith.constant 0 : index
    %c0_3 = arith.constant 0 : index
    %2 = vector.load %arg0[%c1, %c0_2, %c0_3] : memref<2x10x8xf32, #tpu.memory_space<vmem>>, vector<1x6x8xf32>
    %3 = vector.shape_cast %2 : vector<1x6x8xf32> to vector<6x8xf32>
    %cst = arith.constant dense<0.000000e+00> : vector<8xf32>
    %4 = vector.multi_reduction <add>, %1, %cst [0] : vector<6x8xf32> to vector<8xf32>
    %5 = vector.shape_cast %4 : vector<8xf32> to vector<1x8xf32>
    %cst_4 = arith.constant 0.000000e+00 : f32
    %6 = vector.broadcast %cst_4 : f32 to vector<1x8xf32>
    %7 = arith.addf %6, %5 : vector<1x8xf32>
    %cst_5 = arith.constant dense<0.000000e+00> : vector<8xf32>
    %8 = vector.multi_reduction <add>, %3, %cst_5 [0] : vector<6x8xf32> to vector<8xf32>
    %9 = vector.shape_cast %8 : vector<8xf32> to vector<1x8xf32>
    %10 = arith.addf %7, %9 : vector<1x8xf32>
    %cst_6 = arith.constant 0.0833333358 : f32
    %11 = vector.broadcast %cst_6 : f32 to vector<1x8xf32>
    %12 = arith.mulf %10, %11 : vector<1x8xf32>
    %13 = vector.broadcast %12 : vector<1x8xf32> to vector<6x8xf32>
    %14 = arith.subf %1, %13 : vector<6x8xf32>
    %15 = arith.mulf %14, %14 : vector<6x8xf32>
    %cst_7 = arith.constant dense<0.000000e+00> : vector<8xf32>
    %16 = vector.multi_reduction <add>, %15, %cst_7 [0] : vector<6x8xf32> to vector<8xf32>
    %17 = vector.shape_cast %16 : vector<8xf32> to vector<1x8xf32>
    %cst_8 = arith.constant 0.000000e+00 : f32
    %18 = vector.broadcast %cst_8 : f32 to vector<1x8xf32>
    %19 = arith.addf %18, %17 : vector<1x8xf32>
    %20 = vector.broadcast %12 : vector<1x8xf32> to vector<6x8xf32>
    %21 = arith.subf %3, %20 : vector<6x8xf32>
    %22 = arith.mulf %21, %21 : vector<6x8xf32>
    %cst_9 = arith.constant dense<0.000000e+00> : vector<8xf32>
    %23 = vector.multi_reduction <add>, %22, %cst_9 [0] : vector<6x8xf32> to vector<8xf32>
    %24 = vector.shape_cast %23 : vector<8xf32> to vector<1x8xf32>
    %25 = arith.addf %19, %24 : vector<1x8xf32>
    %cst_10 = arith.constant 0.0833333358 : f32
    %26 = vector.broadcast %cst_10 : f32 to vector<1x8xf32>
    %27 = arith.mulf %25, %26 : vector<1x8xf32>
    %cst_11 = arith.constant 9.99999974E-6 : f32
    %28 = vector.broadcast %cst_11 : f32 to vector<1x8xf32>
    %29 = arith.addf %27, %28 : vector<1x8xf32>
    %30 = math.rsqrt %29 : vector<1x8xf32>
    %c0_12 = arith.constant 0 : index
    %c0_13 = arith.constant 0 : index
    %31 = vector.load %arg1[%c0_12, %c0_13] : memref<1x8xf32, #tpu.memory_space<vmem>>, vector<1x8xf32>
    %c0_14 = arith.constant 0 : index
    %c0_15 = arith.constant 0 : index
    %32 = vector.load %arg2[%c0_14, %c0_15] : memref<1x8xf32, #tpu.memory_space<vmem>>, vector<1x8xf32>
    %c0_16 = arith.constant 0 : index
    %c0_17 = arith.constant 0 : index
    %33 = vector.load %arg3[%c0_16, %c0_17] : memref<8x32xf32, #tpu.memory_space<vmem>>, vector<8x32xf32>
    %c0_18 = arith.constant 0 : index
    %c0_19 = arith.constant 0 : index
    %34 = vector.load %arg4[%c0_18, %c0_19] : memref<1x32xf32, #tpu.memory_space<vmem>>, vector<1x32xf32>
    %c0_20 = arith.constant 0 : index
    %c0_21 = arith.constant 0 : index
    %35 = vector.load %arg5[%c0_20, %c0_21] : memref<32x24xf32, #tpu.memory_space<vmem>>, vector<32x24xf32>
    %c0_22 = arith.constant 0 : index
    %c0_23 = arith.constant 0 : index
    %36 = vector.load %arg6[%c0_22, %c0_23] : memref<1x24xf32, #tpu.memory_space<vmem>>, vector<1x24xf32>
    %37 = vector.broadcast %12 : vector<1x8xf32> to vector<6x8xf32>
    %38 = arith.subf %1, %37 : vector<6x8xf32>
    %39 = vector.broadcast %30 : vector<1x8xf32> to vector<6x8xf32>
    %40 = arith.mulf %38, %39 : vector<6x8xf32>
    %41 = vector.broadcast %31 : vector<1x8xf32> to vector<6x8xf32>
    %42 = arith.mulf %40, %41 : vector<6x8xf32>
    %43 = vector.broadcast %32 : vector<1x8xf32> to vector<6x8xf32>
    %44 = arith.addf %42, %43 : vector<6x8xf32>
    %cst_24 = arith.constant dense<0.000000e+00> : vector<6x32xf32>
    %45 = tpu.matmul %44, %33, %cst_24 {dimension_numbers = #tpu.dot_dimension_numbers<[1], [0], [0], [1], [0, 0, 1, 1], [], []>} : vector<6x8xf32>, vector<8x32xf32>, vector<6x32xf32> -> vector<6x32xf32>
    %46 = vector.broadcast %34 : vector<1x32xf32> to vector<6x32xf32>
    %47 = arith.addf %45, %46 : vector<6x32xf32>
    %cst_25 = arith.constant 0.000000e+00 : f32
    %48 = vector.broadcast %cst_25 : f32 to vector<6x32xf32>
    %49 = arith.cmpf ogt, %47, %48 : vector<6x32xf32>
    %cst_26 = arith.constant 0.00999999977 : f32
    %50 = vector.broadcast %cst_26 : f32 to vector<6x32xf32>
    %51 = arith.mulf %50, %47 : vector<6x32xf32>
    %52 = arith.select %49, %47, %51 : vector<6x32xi1>, vector<6x32xf32>
    %cst_27 = arith.constant dense<0.000000e+00> : vector<6x24xf32>
    %53 = tpu.matmul %52, %35, %cst_27 {dimension_numbers = #tpu.dot_dimension_numbers<[1], [0], [0], [1], [0, 0, 1, 1], [], []>} : vector<6x32xf32>, vector<32x24xf32>, vector<6x24xf32> -> vector<6x24xf32>
    %54 = vector.broadcast %36 : vector<1x24xf32> to vector<6x24xf32>
    %55 = arith.mulf %53, %54 : vector<6x24xf32>
    %56 = vector.extract_strided_slice %1 {offsets = [1, 0], sizes = [5, 8], strides = [1, 1]} : vector<6x8xf32> to vector<5x8xf32>
    %c0_28 = arith.constant 0 : index
    %c0_29 = arith.constant 0 : index
    %c0_30 = arith.constant 0 : index
    %57 = vector.load %arg8[%c0_28, %c0_29, %c0_30] : memref<2x5x32xf32, #tpu.memory_space<vmem>>, vector<1x5x8xf32>
    %58 = vector.shape_cast %57 : vector<1x5x8xf32> to vector<5x8xf32>
    %59 = vector.shape_cast %56 : vector<5x8xf32> to vector<1x5x8xf32>
    tpu.vector_store %arg8[%c0_28, %c0_29, %c0_30], %59 {strides = array<i32>} : memref<2x5x32xf32, #tpu.memory_space<vmem>>, vector<1x5x8xf32>,
    %60 = vector.extract_strided_slice %55 {offsets = [1, 0], sizes = [5, 24], strides = [1, 1]} : vector<6x24xf32> to vector<5x24xf32>
    %c0_31 = arith.constant 0 : index
    %c0_32 = arith.constant 0 : index
    %c8 = arith.constant 8 : index
    %61 = vector.load %arg8[%c0_31, %c0_32, %c8] : memref<2x5x32xf32, #tpu.memory_space<vmem>>, vector<1x5x24xf32>
    %62 = vector.shape_cast %61 : vector<1x5x24xf32> to vector<5x24xf32>
    %63 = vector.shape_cast %60 : vector<5x24xf32> to vector<1x5x24xf32>
    tpu.vector_store %arg8[%c0_31, %c0_32, %c8], %63 {strides = array<i32>} : memref<2x5x32xf32, #tpu.memory_space<vmem>>, vector<1x5x24xf32>,
    %64 = vector.extract_strided_slice %1 {offsets = [0, 0], sizes = [1, 8], strides = [1, 1]} : vector<6x8xf32> to vector<1x8xf32>
    %c0_33 = arith.constant 0 : index
    %c0_34 = arith.constant 0 : index
    %65 = vector.load %arg10[%c0_33, %c0_34] : memref<2x32xf32, #tpu.memory_space<vmem>>, vector<1x8xf32>
    tpu.vector_store %arg10[%c0_33, %c0_34], %64 {strides = array<i32>} : memref<2x32xf32, #tpu.memory_space<vmem>>, vector<1x8xf32>,
    %66 = vector.extract_strided_slice %55 {offsets = [0, 0], sizes = [1, 24], strides = [1, 1]} : vector<6x24xf32> to vector<1x24xf32>
    %c0_35 = arith.constant 0 : index
    %c8_36 = arith.constant 8 : index
    %67 = vector.load %arg10[%c0_35, %c8_36] : memref<2x32xf32, #tpu.memory_space<vmem>>, vector<1x24xf32>
    tpu.vector_store %arg10[%c0_35, %c8_36], %66 {strides = array<i32>} : memref<2x32xf32, #tpu.memory_space<vmem>>, vector<1x24xf32>,
    %68 = vector.broadcast %12 : vector<1x8xf32> to vector<6x8xf32>
    %69 = arith.subf %3, %68 : vector<6x8xf32>
    %70 = vector.broadcast %30 : vector<1x8xf32> to vector<6x8xf32>
    %71 = arith.mulf %69, %70 : vector<6x8xf32>
    %72 = vector.broadcast %31 : vector<1x8xf32> to vector<6x8xf32>
    %73 = arith.mulf %71, %72 : vector<6x8xf32>
    %74 = vector.broadcast %32 : vector<1x8xf32> to vector<6x8xf32>
    %75 = arith.addf %73, %74 : vector<6x8xf32>
    %cst_37 = arith.constant dense<0.000000e+00> : vector<6x32xf32>
    %76 = tpu.matmul %75, %33, %cst_37 {dimension_numbers = #tpu.dot_dimension_numbers<[1], [0], [0], [1], [0, 0, 1, 1], [], []>} : vector<6x8xf32>, vector<8x32xf32>, vector<6x32xf32> -> vector<6x32xf32>
    %77 = vector.broadcast %34 : vector<1x32xf32> to vector<6x32xf32>
    %78 = arith.addf %76, %77 : vector<6x32xf32>
    %cst_38 = arith.constant 0.000000e+00 : f32
    %79 = vector.broadcast %cst_38 : f32 to vector<6x32xf32>
    %80 = arith.cmpf ogt, %78, %79 : vector<6x32xf32>
    %cst_39 = arith.constant 0.00999999977 : f32
    %81 = vector.broadcast %cst_39 : f32 to vector<6x32xf32>
    %82 = arith.mulf %81, %78 : vector<6x32xf32>
    %83 = arith.select %80, %78, %82 : vector<6x32xi1>, vector<6x32xf32>
    %cst_40 = arith.constant dense<0.000000e+00> : vector<6x24xf32>
    %84 = tpu.matmul %83, %35, %cst_40 {dimension_numbers = #tpu.dot_dimension_numbers<[1], [0], [0], [1], [0, 0, 1, 1], [], []>} : vector<6x32xf32>, vector<32x24xf32>, vector<6x24xf32> -> vector<6x24xf32>
    %85 = vector.broadcast %36 : vector<1x24xf32> to vector<6x24xf32>
    %86 = arith.mulf %84, %85 : vector<6x24xf32>
    %87 = vector.extract_strided_slice %3 {offsets = [1, 0], sizes = [5, 8], strides = [1, 1]} : vector<6x8xf32> to vector<5x8xf32>
    %c1_41 = arith.constant 1 : index
    %c0_42 = arith.constant 0 : index
    %c0_43 = arith.constant 0 : index
    %88 = vector.load %arg8[%c1_41, %c0_42, %c0_43] : memref<2x5x32xf32, #tpu.memory_space<vmem>>, vector<1x5x8xf32>
    %89 = vector.shape_cast %88 : vector<1x5x8xf32> to vector<5x8xf32>
    %90 = vector.shape_cast %87 : vector<5x8xf32> to vector<1x5x8xf32>
    tpu.vector_store %arg8[%c1_41, %c0_42, %c0_43], %90 {strides = array<i32>} : memref<2x5x32xf32, #tpu.memory_space<vmem>>, vector<1x5x8xf32>,
    %91 = vector.extract_strided_slice %86 {offsets = [1, 0], sizes = [5, 24], strides = [1, 1]} : vector<6x24xf32> to vector<5x24xf32>
    %c1_44 = arith.constant 1 : index
    %c0_45 = arith.constant 0 : index
    %c8_46 = arith.constant 8 : index
    %92 = vector.load %arg8[%c1_44, %c0_45, %c8_46] : memref<2x5x32xf32, #tpu.memory_space<vmem>>, vector<1x5x24xf32>
    %93 = vector.shape_cast %92 : vector<1x5x24xf32> to vector<5x24xf32>
    %94 = vector.shape_cast %91 : vector<5x24xf32> to vector<1x5x24xf32>
    tpu.vector_store %arg8[%c1_44, %c0_45, %c8_46], %94 {strides = array<i32>} : memref<2x5x32xf32, #tpu.memory_space<vmem>>, vector<1x5x24xf32>,
    %95 = vector.extract_strided_slice %3 {offsets = [0, 0], sizes = [1, 8], strides = [1, 1]} : vector<6x8xf32> to vector<1x8xf32>
    %c1_47 = arith.constant 1 : index
    %c0_48 = arith.constant 0 : index
    %96 = vector.load %arg10[%c1_47, %c0_48] : memref<2x32xf32, #tpu.memory_space<vmem>>, vector<1x8xf32>
    tpu.vector_store %arg10[%c1_47, %c0_48], %95 {strides = array<i32>} : memref<2x32xf32, #tpu.memory_space<vmem>>, vector<1x8xf32>,
    %97 = vector.extract_strided_slice %86 {offsets = [0, 0], sizes = [1, 24], strides = [1, 1]} : vector<6x24xf32> to vector<1x24xf32>
    %c1_49 = arith.constant 1 : index
    %c8_50 = arith.constant 8 : index
    %98 = vector.load %arg10[%c1_49, %c8_50] : memref<2x32xf32, #tpu.memory_space<vmem>>, vector<1x24xf32>
    tpu.vector_store %arg10[%c1_49, %c8_50], %97 {strides = array<i32>} : memref<2x32xf32, #tpu.memory_space<vmem>>, vector<1x24xf32>,
    %c0_51 = arith.constant 0 : index
    %c0_52 = arith.constant 0 : index
    %99 = vector.load %arg7[%c0_51, %c0_52] : memref<32x32xf32, #tpu.memory_space<vmem>>, vector<32x32xf32>
    %c0_53 = arith.constant 0 : index
    %c0_54 = arith.constant 0 : index
    %100 = vector.load %arg10[%c0_53, %c0_54] : memref<2x32xf32, #tpu.memory_space<vmem>>, vector<2x32xf32>
    %cst_55 = arith.constant dense<0.000000e+00> : vector<2x32xf32>
    %101 = tpu.matmul %100, %99, %cst_55 {dimension_numbers = #tpu.dot_dimension_numbers<[1], [0], [0], [1], [0, 0, 1, 1], [], []>} : vector<2x32xf32>, vector<32x32xf32>, vector<2x32xf32> -> vector<2x32xf32>
    %102 = vector.extract_strided_slice %101 {offsets = [0, 0], sizes = [1, 32], strides = [1, 1]} : vector<2x32xf32> to vector<1x32xf32>
    %c0_56 = arith.constant 0 : index
    %c0_57 = arith.constant 0 : index
    %c0_58 = arith.constant 0 : index
    %103 = vector.load %arg9[%c0_56, %c0_57, %c0_58] : memref<2x5x32xf32, #tpu.memory_space<vmem>>, vector<1x1x32xf32>
    %104 = vector.shape_cast %103 : vector<1x1x32xf32> to vector<1x32xf32>
    %105 = vector.shape_cast %102 : vector<1x32xf32> to vector<1x1x32xf32>
    tpu.vector_store %arg9[%c0_56, %c0_57, %c0_58], %105 {strides = array<i32>} : memref<2x5x32xf32, #tpu.memory_space<vmem>>, vector<1x1x32xf32>,
    %106 = vector.extract_strided_slice %101 {offsets = [1, 0], sizes = [1, 32], strides = [1, 1]} : vector<2x32xf32> to vector<1x32xf32>
    %c1_59 = arith.constant 1 : index
    %c0_60 = arith.constant 0 : index
    %c0_61 = arith.constant 0 : index
    %107 = vector.load %arg9[%c1_59, %c0_60, %c0_61] : memref<2x5x32xf32, #tpu.memory_space<vmem>>, vector<1x1x32xf32>
    %108 = vector.shape_cast %107 : vector<1x1x32xf32> to vector<1x32xf32>
    %109 = vector.shape_cast %106 : vector<1x32xf32> to vector<1x1x32xf32>
    tpu.vector_store %arg9[%c1_59, %c0_60, %c0_61], %109 {strides = array<i32>} : memref<2x5x32xf32, #tpu.memory_space<vmem>>, vector<1x1x32xf32>,
    %cst_62 = arith.constant dense<0.000000e+00> : vector<2x32xf32>
    %110 = tpu.matmul %101, %99, %cst_62 {dimension_numbers = #tpu.dot_dimension_numbers<[1], [0], [0], [1], [0, 0, 1, 1], [], []>} : vector<2x32xf32>, vector<32x32xf32>, vector<2x32xf32> -> vector<2x32xf32>
    %111 = vector.extract_strided_slice %110 {offsets = [0, 0], sizes = [1, 32], strides = [1, 1]} : vector<2x32xf32> to vector<1x32xf32>
    %c0_63 = arith.constant 0 : index
    %c1_64 = arith.constant 1 : index
    %c0_65 = arith.constant 0 : index
    %112 = vector.load %arg9[%c0_63, %c1_64, %c0_65] : memref<2x5x32xf32, #tpu.memory_space<vmem>>, vector<1x1x32xf32>
    %113 = vector.shape_cast %112 : vector<1x1x32xf32> to vector<1x32xf32>
    %114 = vector.shape_cast %111 : vector<1x32xf32> to vector<1x1x32xf32>
    tpu.vector_store %arg9[%c0_63, %c1_64, %c0_65], %114 {strides = array<i32>} : memref<2x5x32xf32, #tpu.memory_space<vmem>>, vector<1x1x32xf32>,
    %115 = vector.extract_strided_slice %110 {offsets = [1, 0], sizes = [1, 32], strides = [1, 1]} : vector<2x32xf32> to vector<1x32xf32>
    %c1_66 = arith.constant 1 : index
    %c1_67 = arith.constant 1 : index
    %c0_68 = arith.constant 0 : index
    %116 = vector.load %arg9[%c1_66, %c1_67, %c0_68] : memref<2x5x32xf32, #tpu.memory_space<vmem>>, vector<1x1x32xf32>
    %117 = vector.shape_cast %116 : vector<1x1x32xf32> to vector<1x32xf32>
    %118 = vector.shape_cast %115 : vector<1x32xf32> to vector<1x1x32xf32>
    tpu.vector_store %arg9[%c1_66, %c1_67, %c0_68], %118 {strides = array<i32>} : memref<2x5x32xf32, #tpu.memory_space<vmem>>, vector<1x1x32xf32>,
    %cst_69 = arith.constant dense<0.000000e+00> : vector<2x32xf32>
    %119 = tpu.matmul %110, %99, %cst_69 {dimension_numbers = #tpu.dot_dimension_numbers<[1], [0], [0], [1], [0, 0, 1, 1], [], []>} : vector<2x32xf32>, vector<32x32xf32>, vector<2x32xf32> -> vector<2x32xf32>
    %120 = vector.extract_strided_slice %119 {offsets = [0, 0], sizes = [1, 32], strides = [1, 1]} : vector<2x32xf32> to vector<1x32xf32>
    %c0_70 = arith.constant 0 : index
    %c2 = arith.constant 2 : index
    %c0_71 = arith.constant 0 : index
    %121 = vector.load %arg9[%c0_70, %c2, %c0_71] : memref<2x5x32xf32, #tpu.memory_space<vmem>>, vector<1x1x32xf32>
    %122 = vector.shape_cast %121 : vector<1x1x32xf32> to vector<1x32xf32>
    %123 = vector.shape_cast %120 : vector<1x32xf32> to vector<1x1x32xf32>
    tpu.vector_store %arg9[%c0_70, %c2, %c0_71], %123 {strides = array<i32>} : memref<2x5x32xf32, #tpu.memory_space<vmem>>, vector<1x1x32xf32>,
    %124 = vector.extract_strided_slice %119 {offsets = [1, 0], sizes = [1, 32], strides = [1, 1]} : vector<2x32xf32> to vector<1x32xf32>
    %c1_72 = arith.constant 1 : index
    %c2_73 = arith.constant 2 : index
    %c0_74 = arith.constant 0 : index
    %125 = vector.load %arg9[%c1_72, %c2_73, %c0_74] : memref<2x5x32xf32, #tpu.memory_space<vmem>>, vector<1x1x32xf32>
    %126 = vector.shape_cast %125 : vector<1x1x32xf32> to vector<1x32xf32>
    %127 = vector.shape_cast %124 : vector<1x32xf32> to vector<1x1x32xf32>
    tpu.vector_store %arg9[%c1_72, %c2_73, %c0_74], %127 {strides = array<i32>} : memref<2x5x32xf32, #tpu.memory_space<vmem>>, vector<1x1x32xf32>,
    %cst_75 = arith.constant dense<0.000000e+00> : vector<2x32xf32>
    %128 = tpu.matmul %119, %99, %cst_75 {dimension_numbers = #tpu.dot_dimension_numbers<[1], [0], [0], [1], [0, 0, 1, 1], [], []>} : vector<2x32xf32>, vector<32x32xf32>, vector<2x32xf32> -> vector<2x32xf32>
    %129 = vector.extract_strided_slice %128 {offsets = [0, 0], sizes = [1, 32], strides = [1, 1]} : vector<2x32xf32> to vector<1x32xf32>
    %c0_76 = arith.constant 0 : index
    %c3 = arith.constant 3 : index
    %c0_77 = arith.constant 0 : index
    %130 = vector.load %arg9[%c0_76, %c3, %c0_77] : memref<2x5x32xf32, #tpu.memory_space<vmem>>, vector<1x1x32xf32>
    %131 = vector.shape_cast %130 : vector<1x1x32xf32> to vector<1x32xf32>
    %132 = vector.shape_cast %129 : vector<1x32xf32> to vector<1x1x32xf32>
    tpu.vector_store %arg9[%c0_76, %c3, %c0_77], %132 {strides = array<i32>} : memref<2x5x32xf32, #tpu.memory_space<vmem>>, vector<1x1x32xf32>,
    %133 = vector.extract_strided_slice %128 {offsets = [1, 0], sizes = [1, 32], strides = [1, 1]} : vector<2x32xf32> to vector<1x32xf32>
    %c1_78 = arith.constant 1 : index
    %c3_79 = arith.constant 3 : index
    %c0_80 = arith.constant 0 : index
    %134 = vector.load %arg9[%c1_78, %c3_79, %c0_80] : memref<2x5x32xf32, #tpu.memory_space<vmem>>, vector<1x1x32xf32>
    %135 = vector.shape_cast %134 : vector<1x1x32xf32> to vector<1x32xf32>
    %136 = vector.shape_cast %133 : vector<1x32xf32> to vector<1x1x32xf32>
    tpu.vector_store %arg9[%c1_78, %c3_79, %c0_80], %136 {strides = array<i32>} : memref<2x5x32xf32, #tpu.memory_space<vmem>>, vector<1x1x32xf32>,
    %cst_81 = arith.constant dense<0.000000e+00> : vector<2x32xf32>
    %137 = tpu.matmul %128, %99, %cst_81 {dimension_numbers = #tpu.dot_dimension_numbers<[1], [0], [0], [1], [0, 0, 1, 1], [], []>} : vector<2x32xf32>, vector<32x32xf32>, vector<2x32xf32> -> vector<2x32xf32>
    %138 = vector.extract_strided_slice %137 {offsets = [0, 0], sizes = [1, 32], strides = [1, 1]} : vector<2x32xf32> to vector<1x32xf32>
    %c0_82 = arith.constant 0 : index
    %c4 = arith.constant 4 : index
    %c0_83 = arith.constant 0 : index
    %139 = vector.load %arg9[%c0_82, %c4, %c0_83] : memref<2x5x32xf32, #tpu.memory_space<vmem>>, vector<1x1x32xf32>
    %140 = vector.shape_cast %139 : vector<1x1x32xf32> to vector<1x32xf32>
    %141 = vector.shape_cast %138 : vector<1x32xf32> to vector<1x1x32xf32>
    tpu.vector_store %arg9[%c0_82, %c4, %c0_83], %141 {strides = array<i32>} : memref<2x5x32xf32, #tpu.memory_space<vmem>>, vector<1x1x32xf32>,
    %142 = vector.extract_strided_slice %137 {offsets = [1, 0], sizes = [1, 32], strides = [1, 1]} : vector<2x32xf32> to vector<1x32xf32>
    %c1_84 = arith.constant 1 : index
    %c4_85 = arith.constant 4 : index
    %c0_86 = arith.constant 0 : index
    %143 = vector.load %arg9[%c1_84, %c4_85, %c0_86] : memref<2x5x32xf32, #tpu.memory_space<vmem>>, vector<1x1x32xf32>
    %144 = vector.shape_cast %143 : vector<1x1x32xf32> to vector<1x32xf32>
    %145 = vector.shape_cast %142 : vector<1x32xf32> to vector<1x1x32xf32>
    tpu.vector_store %arg9[%c1_84, %c4_85, %c0_86], %145 {strides = array<i32>} : memref<2x5x32xf32, #tpu.memory_space<vmem>>, vector<1x1x32xf32>,
    return
  }
}

</mosaic_0001>

<llo_original>
// kernel: lren_forward.1
$region0: #{lren_forward.1}
  #allocation0 [shape = 'u32[]', space=smem, size = 0x4, offset = 0x4, fixed_abs, tag = 'smem constant byte address 0x4 - core index']
  #allocation1 [shape = 'u32[144,128]{1,0:T(1,128)}', space=vmem, size = 0x12000, scoped, tag = 'internal scratch']
  #allocation2 [shape = 'f32[2,32]{1,0:T(2,128)}', space=vmem, size = 0x400, scoped, tag = 'scratch operand']
  %s0 = inlined_call_operand.vmem [shape: f32[2,10,8], index: 0, kind: input, shape index: {}]
  %s1 = inlined_call_operand.vmem [shape: f32[1,8], index: 1, kind: input, shape index: {}]
  %s2 = inlined_call_operand.vmem [shape: f32[1,8], index: 2, kind: input, shape index: {}]
  %s3 = inlined_call_operand.vmem [shape: f32[8,32], index: 3, kind: input, shape index: {}]
  %s4 = inlined_call_operand.vmem [shape: f32[1,32], index: 4, kind: input, shape index: {}]
  %s5 = inlined_call_operand.vmem [shape: f32[32,24], index: 5, kind: input, shape index: {}]
  %s6 = inlined_call_operand.vmem [shape: f32[1,24], index: 6, kind: input, shape index: {}]
  %s7 = inlined_call_operand.vmem [shape: f32[32,32], index: 7, kind: input, shape index: {}]
  %s8 = inlined_call_operand.vmem [shape: f32[2,5,32], index: 8, kind: output, shape index: {0}]
  %s9 = inlined_call_operand.vmem [shape: f32[2,5,32], index: 9, kind: output, shape index: {1}]
  %10 = xla_tuple %s8, %s9
  %s11 = sld [smem:[#allocation0]]
  $region50: #{lren_forward.1} parent=0
    _
  %s13 = ssub.s32 1, %s11
  %s14 = scalar_select 0, %s13, %s11
  // Predicated region
  $region2: #{lren_forward.1} parent=0 // pred_check
    _
  $region3: #{lren_forward.1} parent=0 // pred_check_branch
    %16 = sbr.rel (0) target = $region5
  $region4: #{lren_forward.1} parent=0 // pred_region
    _
  $region5: #{lren_forward.1} parent=0 // pred_fallthru
    _
  // Predicated region
  $region6: #{lren_forward.1} parent=0 // pred_check
    _
  $region7: #{lren_forward.1} parent=0 // pred_check_branch
    %18 = sbr.rel (0) target = $region9
  $region8: #{lren_forward.1} parent=0 // pred_region
    _
  $region9: #{lren_forward.1} parent=0 // pred_fallthru
    _
  // Predicated region
  $region10: #{lren_forward.1} parent=0 // pred_check
    _
  $region11: #{lren_forward.1} parent=0 // pred_check_branch
    %20 = sbr.rel (0) target = $region13
  $region12: #{lren_forward.1} parent=0 // pred_region
    _
  $region13: #{lren_forward.1} parent=0 // pred_fallthru
    _
  // Predicated region
  $region14: #{lren_forward.1} parent=0 // pred_check
    _
  $region15: #{lren_forward.1} parent=0 // pred_check_branch
    %22 = sbr.rel (0) target = $region17
  $region16: #{lren_forward.1} parent=0 // pred_region
    _
  $region17: #{lren_forward.1} parent=0 // pred_fallthru
    _
  // Predicated region
  $region18: #{lren_forward.1} parent=0 // pred_check
    _
  $region19: #{lren_forward.1} parent=0 // pred_check_branch
    %24 = sbr.rel (0) target = $region21
  $region20: #{lren_forward.1} parent=0 // pred_region
    _
  $region21: #{lren_forward.1} parent=0 // pred_fallthru
    _
  // Predicated region
  $region22: #{lren_forward.1} parent=0 // pred_check
    _
  $region23: #{lren_forward.1} parent=0 // pred_check_branch
    %26 = sbr.rel (0) target = $region25
  $region24: #{lren_forward.1} parent=0 // pred_region
    _
  $region25: #{lren_forward.1} parent=0 // pred_fallthru
    _
  // Predicated region
  $region26: #{lren_forward.1} parent=0 // pred_check
    _
  $region27: #{lren_forward.1} parent=0 // pred_check_branch
    %28 = sbr.rel (0) target = $region29
  $region28: #{lren_forward.1} parent=0 // pred_region
    _
  $region29: #{lren_forward.1} parent=0 // pred_fallthru
    _
  // Predicated region
  $region30: #{lren_forward.1} parent=0 // pred_check
    _
  $region31: #{lren_forward.1} parent=0 // pred_check_branch
    %30 = sbr.rel (0) target = $region33
  $region32: #{lren_forward.1} parent=0 // pred_region
    _
  $region33: #{lren_forward.1} parent=0 // pred_fallthru
    _
  %v31 = vld [vmem:[%s0] sm:$0x3f]
  %s32 = scalar_lea.vmem %s0, 16
  %v33 = vld [vmem:[%s32] sm:$0x3f]
  %vm34 = vcmask 62464
  %v35 = vsel %vm34, %v31, 0.0
  %v36 = vrot.slane %v35, 4
  %v37 = vadd.f32 %v35, %v36
  %v38 = vrot.slane %v37, 2
  %v39 = vadd.f32 %v37, %v38
  %v40 = vrot.slane %v39, 1
  %v41 = vadd.f32 %v39, %v40
  %v42 = vadd.f32 %v41, 0.0
  %v43 = vsel %vm34, %v33, 0.0
  %v44 = vrot.slane %v43, 4
  %v45 = vadd.f32 %v43, %v44
  %v46 = vrot.slane %v45, 2
  %v47 = vadd.f32 %v45, %v46
  %v48 = vrot.slane %v47, 1
  %v49 = vadd.f32 %v47, %v48
  %v50 = vadd.f32 %v42, %v49
  %v51 = vmul.f32 %v50, 0.083333336
  %v52 = vsub.f32 %v31, %v51
  %v53 = vmul.f32 %v52, %v52
  %v54 = vsel %vm34, %v53, 0.0
  %v55 = vrot.slane %v54, 4
  %v56 = vadd.f32 %v54, %v55
  %v57 = vrot.slane %v56, 2
  %v58 = vadd.f32 %v56, %v57
  %v59 = vrot.slane %v58, 1
  %v60 = vadd.f32 %v58, %v59
  %v61 = vadd.f32 %v60, 0.0
  %v62 = vsub.f32 %v33, %v51
  %v63 = vmul.f32 %v62, %v62
  %v64 = vsel %vm34, %v63, 0.0
  %v65 = vrot.slane %v64, 4
  %v66 = vadd.f32 %v64, %v65
  %v67 = vrot.slane %v66, 2
  %v68 = vadd.f32 %v66, %v67
  %v69 = vrot.slane %v68, 1
  %v70 = vadd.f32 %v68, %v69
  %v71 = vadd.f32 %v61, %v70
  %v72 = vmul.f32 %v71, 0.083333336
  %v73 = vadd.f32 %v72, 1e-05
  %v74 = vrsqrt.pop %v73
  %v75 = vld [vmem:[%s1] sm:$0x1]
  %v76 = vld [vmem:[%s2] sm:$0x1]
  %v77 = vld [vmem:[%s3] sm:$0xff]
  %v78 = vld [vmem:[%s4] sm:$0x1]
  %v79 = vld [vmem:[%s5] sm:$0xff]
  %v80 = vld [vmem:[%s5 + $0x8] sm:$0xff]
  %v81 = vld [vmem:[%s5 + $0x10] sm:$0xff]
  %v82 = vld [vmem:[%s5 + $0x18] sm:$0xff]
  %v83 = vld [vmem:[%s6] sm:$0x1]
  %v84 = vmul.f32 %v52, %v74
  %v86 = vlaneseq
  %v87 = vshrl.u32 %v86, 7
  %v88 = vsub.s32 0, %v87
  %v89 = vrot.slane %v75, %v88
  %v91 = vmul.f32 %v84, %v89
  %v93 = vlaneseq
  %v94 = vshrl.u32 %v93, 7
  %v95 = vsub.s32 0, %v94
  %v96 = vrot.slane %v76, %v95
  %v98 = vadd.f32 %v91, %v96
  %v100 = vlaneseq
  %v101 = vshrl.u32 %v100, 7
  %v102 = vsub.s32 0, %v101
  %v103 = vrot.slane %v78, %v102
  %vm105 = vcmask 64512
  %v107 = vsel %vm105, %v98, 0
  %109 = vmatprep.subr.mxu0 0.0
  %110 = vmatpush1.msra.mxu0 0.0
  %111 = vmatprep.subr.mxu0 0.0
  %112 = vmatpush1.msra.mxu0 0.0
  %113 = vmatprep.subr.mxu0 0.0
  %114 = vmatpush1.msra.mxu0 0.0
  %115 = vmatprep.subr.mxu0 0.0
  %116 = vmatpush1.msra.mxu0 0.0
  %117 = vmatprep.subr.mxu0 0.0
  %118 = vmatpush1.msra.mxu0 0.0
  %119 = vmatprep.subr.mxu0 0.0
  %120 = vmatpush1.msra.mxu0 0.0
  %121 = vmatprep.subr.mxu0 0.0
  %122 = vmatpush1.msra.mxu0 0.0
  %123 = vmatprep.subr.mxu0 0.0
  %124 = vmatpush1.msra.mxu0 0.0
  %125 = vmatprep.subr.mxu0 0.0
  %126 = vmatpush1.msra.mxu0 0.0
  %127 = vmatprep.subr.mxu0 0.0
  %128 = vmatpush1.msra.mxu0 0.0
  %129 = vmatprep.subr.mxu0 0.0
  %130 = vmatpush1.msra.mxu0 0.0
  %131 = vmatprep.subr.mxu0 0.0
  %132 = vmatpush1.msra.mxu0 0.0
  %133 = vmatprep.subr.mxu0 0.0
  %134 = vmatpush1.msra.mxu0 0.0
  %135 = vmatprep.subr.mxu0 0.0
  %136 = vmatpush1.msra.mxu0 0.0
  %137 = vmatprep.subr.mxu0 0.0
  %138 = vmatpush1.msra.mxu0 0.0
  %139 = vmatprep.subr.mxu0 0.0
  %140 = vmatpush1.msra.mxu0 %v77
  %141 = vmatprep.subr.mxu0 0.0
  %142 = vmatpush2.msra.mxu0 0.0
  %143 = vmatprep.subr.mxu0 0.0
  %144 = vmatpush2.msra.mxu0 0.0
  %145 = vmatprep.subr.mxu0 0.0
  %146 = vmatpush2.msra.mxu0 0.0
  %147 = vmatprep.subr.mxu0 0.0
  %148 = vmatpush2.msra.mxu0 0.0
  %149 = vmatprep.subr.mxu0 0.0
  %150 = vmatpush2.msra.mxu0 0.0
  %151 = vmatprep.subr.mxu0 0.0
  %152 = vmatpush2.msra.mxu0 0.0
  %153 = vmatprep.subr.mxu0 0.0
  %154 = vmatpush2.msra.mxu0 0.0
  %155 = vmatprep.subr.mxu0 0.0
  %156 = vmatpush2.msra.mxu0 0.0
  %157 = vmatprep.subr.mxu0 0.0
  %158 = vmatpush2.msra.mxu0 0.0
  %159 = vmatprep.subr.mxu0 0.0
  %160 = vmatpush2.msra.mxu0 0.0
  %161 = vmatprep.subr.mxu0 0.0
  %162 = vmatpush2.msra.mxu0 0.0
  %163 = vmatprep.subr.mxu0 0.0
  %164 = vmatpush2.msra.mxu0 0.0
  %165 = vmatprep.subr.mxu0 0.0
  %166 = vmatpush2.msra.mxu0 0.0
  %167 = vmatprep.subr.mxu0 0.0
  %168 = vmatpush2.msra.mxu0 0.0
  %169 = vmatprep.subr.mxu0 0.0
  %170 = vmatpush2.msra.mxu0 0.0
  %171 = vmatprep.subr.mxu0 0.0
  %172 = vmatpush2.msra.mxu0 0.0
  %173 = vmatprep.mubr.f32.mxu0 0.0
  %174 = vmatmul.mubr.f32.gmra.mxu0 %v107
  %v175 = vpop.f32.mrf.mxu0
  %v176 = vadd.f32 %v103, %v175
  %v177 = vpop.f32.mrf.mxu0
  %178 = vdwg.mxu0
  %vm179 = vcmp.gt.f32.partialorder %v176, 0.0
  %v180 = vmul.f32 %v176, 0.01
  %v181 = vsel %vm179, %v176, %v180
  %vm182 = vcmask 261120
  %v184 = vsel %vm182, %v181, 0
  %186 = vmatprep.subr.mxu0 0.0
  %187 = vmatpush1.msra.mxu0 0.0
  %188 = vmatprep.subr.mxu0 0.0
  %189 = vmatpush1.msra.mxu0 0.0
  %190 = vmatprep.subr.mxu0 0.0
  %191 = vmatpush1.msra.mxu0 0.0
  %192 = vmatprep.subr.mxu0 0.0
  %193 = vmatpush1.msra.mxu0 0.0
  %194 = vmatprep.subr.mxu0 0.0
  %195 = vmatpush1.msra.mxu0 0.0
  %196 = vmatprep.subr.mxu0 0.0
  %197 = vmatpush1.msra.mxu0 0.0
  %198 = vmatprep.subr.mxu0 0.0
  %199 = vmatpush1.msra.mxu0 0.0
  %200 = vmatprep.subr.mxu0 0.0
  %201 = vmatpush1.msra.mxu0 0.0
  %202 = vmatprep.subr.mxu0 0.0
  %203 = vmatpush1.msra.mxu0 0.0
  %204 = vmatprep.subr.mxu0 0.0
  %205 = vmatpush1.msra.mxu0 0.0
  %206 = vmatprep.subr.mxu0 0.0
  %207 = vmatpush1.msra.mxu0 0.0
  %208 = vmatprep.subr.mxu0 0.0
  %209 = vmatpush1.msra.mxu0 0.0
  %210 = vmatprep.subr.mxu0 0.0
  %211 = vmatpush1.msra.mxu0 %v82
  %212 = vmatprep.subr.mxu0 0.0
  %213 = vmatpush1.msra.mxu0 %v81
  %214 = vmatprep.subr.mxu0 0.0
  %215 = vmatpush1.msra.mxu0 %v80
  %216 = vmatprep.subr.mxu0 0.0
  %217 = vmatpush1.msra.mxu0 %v79
  %218 = vmatprep.subr.mxu0 0.0
  %219 = vmatpush2.msra.mxu0 0.0
  %220 = vmatprep.subr.mxu0 0.0
  %221 = vmatpush2.msra.mxu0 0.0
  %222 = vmatprep.subr.mxu0 0.0
  %223 = vmatpush2.msra.mxu0 0.0
  %224 = vmatprep.subr.mxu0 0.0
  %225 = vmatpush2.msra.mxu0 0.0
  %226 = vmatprep.subr.mxu0 0.0
  %227 = vmatpush2.msra.mxu0 0.0
  %228 = vmatprep.subr.mxu0 0.0
  %229 = vmatpush2.msra.mxu0 0.0
  %230 = vmatprep.subr.mxu0 0.0
  %231 = vmatpush2.msra.mxu0 0.0
  %232 = vmatprep.subr.mxu0 0.0
  %233 = vmatpush2.msra.mxu0 0.0
  %234 = vmatprep.subr.mxu0 0.0
  %235 = vmatpush2.msra.mxu0 0.0
  %236 = vmatprep.subr.mxu0 0.0
  %237 = vmatpush2.msra.mxu0 0.0
  %238 = vmatprep.subr.mxu0 0.0
  %239 = vmatpush2.msra.mxu0 0.0
  %240 = vmatprep.subr.mxu0 0.0
  %241 = vmatpush2.msra.mxu0 0.0
  %242 = vmatprep.subr.mxu0 0.0
  %243 = vmatpush2.msra.mxu0 0.0
  %244 = vmatprep.subr.mxu0 0.0
  %245 = vmatpush2.msra.mxu0 0.0
  %246 = vmatprep.subr.mxu0 0.0
  %247 = vmatpush2.msra.mxu0 0.0
  %248 = vmatprep.subr.mxu0 0.0
  %249 = vmatpush2.msra.mxu0 0.0
  %250 = vmatprep.mubr.f32.mxu0 0.0
  %251 = vmatmul.mubr.f32.gmra.mxu0 %v184
  %v252 = vpop.f32.mrf.mxu0
  %v253 = vadd.f32 0.0, %v252
  %v254 = vpop.f32.mrf.mxu0
  %255 = vdwg.mxu0
  %v257 = vlaneseq
  %v258 = vshrl.u32 %v257, 7
  %v259 = vsub.s32 0, %v258
  %v260 = vrot.slane %v83, %v259
  %v262 = vmul.f32 %v253, %v260
  %vm263 = vcmask 62465
  %264 = vst.msk [vmem:[%s8 - $0x1] sm:$0x3e] %vm263, %v31
  %266 = vrot.lane.b32.xlu0 %v262, 8
  %v267 = vpop.permute.xlu0 %266
  %vm269 = vcmask 259137
  %270 = vst.msk [vmem:[%s8 - $0x1] sm:$0x3e] %vm269, %v267
  %vm271 = vcmask 57344
  %272 = vst.msk [vmem:[#allocation2] sm:$0x1] %vm271, %v31
  %vm273 = vcmask 254016
  %274 = vst.msk [vmem:[#allocation2] sm:$0x1] %vm273, %v267
  %v275 = vmul.f32 %v62, %v74
  %v276 = vmul.f32 %v275, %v89
  %v277 = vadd.f32 %v276, %v96
  %v279 = vsel %vm105, %v277, 0
  %281 = vmatprep.subr.mxu0 0.0
  %282 = vmatpush1.msra.mxu0 0.0
  %283 = vmatprep.subr.mxu0 0.0
  %284 = vmatpush1.msra.mxu0 0.0
  %285 = vmatprep.subr.mxu0 0.0
  %286 = vmatpush1.msra.mxu0 0.0
  %287 = vmatprep.subr.mxu0 0.0
  %288 = vmatpush1.msra.mxu0 0.0
  %289 = vmatprep.subr.mxu0 0.0
  %290 = vmatpush1.msra.mxu0 0.0
  %291 = vmatprep.subr.mxu0 0.0
  %292 = vmatpush1.msra.mxu0 0.0
  %293 = vmatprep.subr.mxu0 0.0
  %294 = vmatpush1.msra.mxu0 0.0
  %295 = vmatprep.subr.mxu0 0.0
  %296 = vmatpush1.msra.mxu0 0.0
  %297 = vmatprep.subr.mxu0 0.0
  %298 = vmatpush1.msra.mxu0 0.0
  %299 = vmatprep.subr.mxu0 0.0
  %300 = vmatpush1.msra.mxu0 0.0
  %301 = vmatprep.subr.mxu0 0.0
  %302 = vmatpush1.msra.mxu0 0.0
  %303 = vmatprep.subr.mxu0 0.0
  %304 = vmatpush1.msra.mxu0 0.0
  %305 = vmatprep.subr.mxu0 0.0
  %306 = vmatpush1.msra.mxu0 0.0
  %307 = vmatprep.subr.mxu0 0.0
  %308 = vmatpush1.msra.mxu0 0.0
  %309 = vmatprep.subr.mxu0 0.0
  %310 = vmatpush1.msra.mxu0 0.0
  %311 = vmatprep.subr.mxu0 0.0
  %312 = vmatpush1.msra.mxu0 %v77
  %313 = vmatprep.subr.mxu0 0.0
  %314 = vmatpush2.msra.mxu0 0.0
  %315 = vmatprep.subr.mxu0 0.0
  %316 = vmatpush2.msra.mxu0 0.0
  %317 = vmatprep.subr.mxu0 0.0
  %318 = vmatpush2.msra.mxu0 0.0
  %319 = vmatprep.subr.mxu0 0.0
  %320 = vmatpush2.msra.mxu0 0.0
  %321 = vmatprep.subr.mxu0 0.0
  %322 = vmatpush2.msra.mxu0 0.0
  %323 = vmatprep.subr.mxu0 0.0
  %324 = vmatpush2.msra.mxu0 0.0
  %325 = vmatprep.subr.mxu0 0.0
  %326 = vmatpush2.msra.mxu0 0.0
  %327 = vmatprep.subr.mxu0 0.0
  %328 = vmatpush2.msra.mxu0 0.0
  %329 = vmatprep.subr.mxu0 0.0
  %330 = vmatpush2.msra.mxu0 0.0
  %331 = vmatprep.subr.mxu0 0.0
  %332 = vmatpush2.msra.mxu0 0.0
  %333 = vmatprep.subr.mxu0 0.0
  %334 = vmatpush2.msra.mxu0 0.0
  %335 = vmatprep.subr.mxu0 0.0
  %336 = vmatpush2.msra.mxu0 0.0
  %337 = vmatprep.subr.mxu0 0.0
  %338 = vmatpush2.msra.mxu0 0.0
  %339 = vmatprep.subr.mxu0 0.0
  %340 = vmatpush2.msra.mxu0 0.0
  %341 = vmatprep.subr.mxu0 0.0
  %342 = vmatpush2.msra.mxu0 0.0
  %343 = vmatprep.subr.mxu0 0.0
  %344 = vmatpush2.msra.mxu0 0.0
  %345 = vmatprep.mubr.f32.mxu0 0.0
  %346 = vmatmul.mubr.f32.gmra.mxu0 %v279
  %v347 = vpop.f32.mrf.mxu0
  %v348 = vadd.f32 %v103, %v347
  %v349 = vpop.f32.mrf.mxu0
  %350 = vdwg.mxu0
  %vm351 = vcmp.gt.f32.partialorder %v348, 0.0
  %v352 = vmul.f32 %v348, 0.01
  %v353 = vsel %vm351, %v348, %v352
  %v355 = vsel %vm182, %v353, 0
  %357 = vmatprep.subr.mxu0 0.0
  %358 = vmatpush1.msra.mxu0 0.0
  %359 = vmatprep.subr.mxu0 0.0
  %360 = vmatpush1.msra.mxu0 0.0
  %361 = vmatprep.subr.mxu0 0.0
  %362 = vmatpush1.msra.mxu0 0.0
  %363 = vmatprep.subr.mxu0 0.0
  %364 = vmatpush1.msra.mxu0 0.0
  %365 = vmatprep.subr.mxu0 0.0
  %366 = vmatpush1.msra.mxu0 0.0
  %367 = vmatprep.subr.mxu0 0.0
  %368 = vmatpush1.msra.mxu0 0.0
  %369 = vmatprep.subr.mxu0 0.0
  %370 = vmatpush1.msra.mxu0 0.0
  %371 = vmatprep.subr.mxu0 0.0
  %372 = vmatpush1.msra.mxu0 0.0
  %373 = vmatprep.subr.mxu0 0.0
  %374 = vmatpush1.msra.mxu0 0.0
  %375 = vmatprep.subr.mxu0 0.0
  %376 = vmatpush1.msra.mxu0 0.0
  %377 = vmatprep.subr.mxu0 0.0
  %378 = vmatpush1.msra.mxu0 0.0
  %379 = vmatprep.subr.mxu0 0.0
  %380 = vmatpush1.msra.mxu0 0.0
  %381 = vmatprep.subr.mxu0 0.0
  %382 = vmatpush1.msra.mxu0 %v82
  %383 = vmatprep.subr.mxu0 0.0
  %384 = vmatpush1.msra.mxu0 %v81
  %385 = vmatprep.subr.mxu0 0.0
  %386 = vmatpush1.msra.mxu0 %v80
  %387 = vmatprep.subr.mxu0 0.0
  %388 = vmatpush1.msra.mxu0 %v79
  %389 = vmatprep.subr.mxu0 0.0
  %390 = vmatpush2.msra.mxu0 0.0
  %391 = vmatprep.subr.mxu0 0.0
  %392 = vmatpush2.msra.mxu0 0.0
  %393 = vmatprep.subr.mxu0 0.0
  %394 = vmatpush2.msra.mxu0 0.0
  %395 = vmatprep.subr.mxu0 0.0
  %396 = vmatpush2.msra.mxu0 0.0
  %397 = vmatprep.subr.mxu0 0.0
  %398 = vmatpush2.msra.mxu0 0.0
  %399 = vmatprep.subr.mxu0 0.0
  %400 = vmatpush2.msra.mxu0 0.0
  %401 = vmatprep.subr.mxu0 0.0
  %402 = vmatpush2.msra.mxu0 0.0
  %403 = vmatprep.subr.mxu0 0.0
  %404 = vmatpush2.msra.mxu0 0.0
  %405 = vmatprep.subr.mxu0 0.0
  %406 = vmatpush2.msra.mxu0 0.0
  %407 = vmatprep.subr.mxu0 0.0
  %408 = vmatpush2.msra.mxu0 0.0
  %409 = vmatprep.subr.mxu0 0.0
  %410 = vmatpush2.msra.mxu0 0.0
  %411 = vmatprep.subr.mxu0 0.0
  %412 = vmatpush2.msra.mxu0 0.0
  %413 = vmatprep.subr.mxu0 0.0
  %414 = vmatpush2.msra.mxu0 0.0
  %415 = vmatprep.subr.mxu0 0.0
  %416 = vmatpush2.msra.mxu0 0.0
  %417 = vmatprep.subr.mxu0 0.0
  %418 = vmatpush2.msra.mxu0 0.0
  %419 = vmatprep.subr.mxu0 0.0
  %420 = vmatpush2.msra.mxu0 0.0
  %421 = vmatprep.mubr.f32.mxu0 0.0
  %422 = vmatmul.mubr.f32.gmra.mxu0 %v355
  %v423 = vpop.f32.mrf.mxu0
  %v424 = vadd.f32 0.0, %v423
  %v425 = vpop.f32.mrf.mxu0
  %426 = vdwg.mxu0
  %v427 = vmul.f32 %v424, %v260
  %s428 = scalar_lea.vmem %s8, 8
  %429 = vst.msk [vmem:[%s428 - $0x1] sm:$0x3e] %vm263, %v33
  %431 = vrot.lane.b32.xlu0 %v427, 8
  %v432 = vpop.permute.xlu0 %431
  %434 = vst.msk [vmem:[%s428 - $0x1] sm:$0x3e] %vm269, %v432
  %435 = vst.msk [vmem:[#allocation2 + $0x1] sm:$0x1] %vm271, %v33
  %436 = vst.msk [vmem:[#allocation2 + $0x1] sm:$0x1] %vm273, %v432
  %v437 = vld [vmem:[%s7] sm:$0xff]
  %v438 = vld [vmem:[%s7 + $0x8] sm:$0xff]
  %v439 = vld [vmem:[%s7 + $0x10] sm:$0xff]
  %v440 = vld [vmem:[%s7 + $0x18] sm:$0xff]
  %v441 = vld [vmem:[#allocation2] sm:$0x3]
  %v443 = vsel %vm182, %v441, 0
  %445 = vmatprep.subr.mxu0 0.0
  %446 = vmatpush1.msra.mxu0 0.0
  %447 = vmatprep.subr.mxu0 0.0
  %448 = vmatpush1.msra.mxu0 0.0
  %449 = vmatprep.subr.mxu0 0.0
  %450 = vmatpush1.msra.mxu0 0.0
  %451 = vmatprep.subr.mxu0 0.0
  %452 = vmatpush1.msra.mxu0 0.0
  %453 = vmatprep.subr.mxu0 0.0
  %454 = vmatpush1.msra.mxu0 0.0
  %455 = vmatprep.subr.mxu0 0.0
  %456 = vmatpush1.msra.mxu0 0.0
  %457 = vmatprep.subr.mxu0 0.0
  %458 = vmatpush1.msra.mxu0 0.0
  %459 = vmatprep.subr.mxu0 0.0
  %460 = vmatpush1.msra.mxu0 0.0
  %461 = vmatprep.subr.mxu0 0.0
  %462 = vmatpush1.msra.mxu0 0.0
  %463 = vmatprep.subr.mxu0 0.0
  %464 = vmatpush1.msra.mxu0 0.0
  %465 = vmatprep.subr.mxu0 0.0
  %466 = vmatpush1.msra.mxu0 0.0
  %467 = vmatprep.subr.mxu0 0.0
  %468 = vmatpush1.msra.mxu0 0.0
  %469 = vmatprep.subr.mxu0 0.0
  %470 = vmatpush1.msra.mxu0 %v440
  %471 = vmatprep.subr.mxu0 0.0
  %472 = vmatpush1.msra.mxu0 %v439
  %473 = vmatprep.subr.mxu0 0.0
  %474 = vmatpush1.msra.mxu0 %v438
  %475 = vmatprep.subr.mxu0 0.0
  %476 = vmatpush1.msra.mxu0 %v437
  %477 = vmatprep.subr.mxu0 0.0
  %478 = vmatpush2.msra.mxu0 0.0
  %479 = vmatprep.subr.mxu0 0.0
  %480 = vmatpush2.msra.mxu0 0.0
  %481 = vmatprep.subr.mxu0 0.0
  %482 = vmatpush2.msra.mxu0 0.0
  %483 = vmatprep.subr.mxu0 0.0
  %484 = vmatpush2.msra.mxu0 0.0
  %485 = vmatprep.subr.mxu0 0.0
  %486 = vmatpush2.msra.mxu0 0.0
  %487 = vmatprep.subr.mxu0 0.0
  %488 = vmatpush2.msra.mxu0 0.0
  %489 = vmatprep.subr.mxu0 0.0
  %490 = vmatpush2.msra.mxu0 0.0
  %491 = vmatprep.subr.mxu0 0.0
  %492 = vmatpush2.msra.mxu0 0.0
  %493 = vmatprep.subr.mxu0 0.0
  %494 = vmatpush2.msra.mxu0 0.0
  %495 = vmatprep.subr.mxu0 0.0
  %496 = vmatpush2.msra.mxu0 0.0
  %497 = vmatprep.subr.mxu0 0.0
  %498 = vmatpush2.msra.mxu0 0.0
  %499 = vmatprep.subr.mxu0 0.0
  %500 = vmatpush2.msra.mxu0 0.0
  %501 = vmatprep.subr.mxu0 0.0
  %502 = vmatpush2.msra.mxu0 0.0
  %503 = vmatprep.subr.mxu0 0.0
  %504 = vmatpush2.msra.mxu0 0.0
  %505 = vmatprep.subr.mxu0 0.0
  %506 = vmatpush2.msra.mxu0 0.0
  %507 = vmatprep.subr.mxu0 0.0
  %508 = vmatpush2.msra.mxu0 0.0
  %509 = vmatprep.mubr.f32.mxu0 0.0
  %510 = vmatmul.mubr.f32.gmra.mxu0 %v443
  %v511 = vpop.f32.mrf.mxu0
  %v512 = vadd.f32 0.0, %v511
  %v513 = vpop.f32.mrf.mxu0
  %514 = vdwg.mxu0
  %vm515 = vcmask 253952
  %516 = vst.msk [vmem:[%s9] sm:$0x1] %vm515, %v512
  %s517 = scalar_lea.vmem %s9, 8
  %vm518 = vcmask 254977
  %519 = vst.msk [vmem:[%s517 - $0x1] sm:$0x2] %vm518, %v512
  %v521 = vsel %vm182, %v512, 0
  %523 = vmatprep.subr.mxu0 0.0
  %524 = vmatpush1.msra.mxu0 0.0
  %525 = vmatprep.subr.mxu0 0.0
  %526 = vmatpush1.msra.mxu0 0.0
  %527 = vmatprep.subr.mxu0 0.0
  %528 = vmatpush1.msra.mxu0 0.0
  %529 = vmatprep.subr.mxu0 0.0
  %530 = vmatpush1.msra.mxu0 0.0
  %531 = vmatprep.subr.mxu0 0.0
  %532 = vmatpush1.msra.mxu0 0.0
  %533 = vmatprep.subr.mxu0 0.0
  %534 = vmatpush1.msra.mxu0 0.0
  %535 = vmatprep.subr.mxu0 0.0
  %536 = vmatpush1.msra.mxu0 0.0
  %537 = vmatprep.subr.mxu0 0.0
  %538 = vmatpush1.msra.mxu0 0.0
  %539 = vmatprep.subr.mxu0 0.0
  %540 = vmatpush1.msra.mxu0 0.0
  %541 = vmatprep.subr.mxu0 0.0
  %542 = vmatpush1.msra.mxu0 0.0
  %543 = vmatprep.subr.mxu0 0.0
  %544 = vmatpush1.msra.mxu0 0.0
  %545 = vmatprep.subr.mxu0 0.0
  %546 = vmatpush1.msra.mxu0 0.0
  %547 = vmatprep.subr.mxu0 0.0
  %548 = vmatpush1.msra.mxu0 %v440
  %549 = vmatprep.subr.mxu0 0.0
  %550 = vmatpush1.msra.mxu0 %v439
  %551 = vmatprep.subr.mxu0 0.0
  %552 = vmatpush1.msra.mxu0 %v438
  %553 = vmatprep.subr.mxu0 0.0
  %554 = vmatpush1.msra.mxu0 %v437
  %555 = vmatprep.subr.mxu0 0.0
  %556 = vmatpush2.msra.mxu0 0.0
  %557 = vmatprep.subr.mxu0 0.0
  %558 = vmatpush2.msra.mxu0 0.0
  %559 = vmatprep.subr.mxu0 0.0
  %560 = vmatpush2.msra.mxu0 0.0
  %561 = vmatprep.subr.mxu0 0.0
  %562 = vmatpush2.msra.mxu0 0.0
  %563 = vmatprep.subr.mxu0 0.0
  %564 = vmatpush2.msra.mxu0 0.0
  %565 = vmatprep.subr.mxu0 0.0
  %566 = vmatpush2.msra.mxu0 0.0
  %567 = vmatprep.subr.mxu0 0.0
  %568 = vmatpush2.msra.mxu0 0.0
  %569 = vmatprep.subr.mxu0 0.0
  %570 = vmatpush2.msra.mxu0 0.0
  %571 = vmatprep.subr.mxu0 0.0
  %572 = vmatpush2.msra.mxu0 0.0
  %573 = vmatprep.subr.mxu0 0.0
  %574 = vmatpush2.msra.mxu0 0.0
  %575 = vmatprep.subr.mxu0 0.0
  %576 = vmatpush2.msra.mxu0 0.0
  %577 = vmatprep.subr.mxu0 0.0
  %578 = vmatpush2.msra.mxu0 0.0
  %579 = vmatprep.subr.mxu0 0.0
  %580 = vmatpush2.msra.mxu0 0.0
  %581 = vmatprep.subr.mxu0 0.0
  %582 = vmatpush2.msra.mxu0 0.0
  %583 = vmatprep.subr.mxu0 0.0
  %584 = vmatpush2.msra.mxu0 0.0
  %585 = vmatprep.subr.mxu0 0.0
  %586 = vmatpush2.msra.mxu0 0.0
  %587 = vmatprep.mubr.f32.mxu0 0.0
  %588 = vmatmul.mubr.f32.gmra.mxu0 %v521
  %v589 = vpop.f32.mrf.mxu0
  %v590 = vadd.f32 0.0, %v589
  %v591 = vpop.f32.mrf.mxu0
  %592 = vdwg.mxu0
  %593 = vst.msk [vmem:[%s9 + $0x1] sm:$0x1] %vm515, %v590
  %594 = vst.msk [vmem:[%s517] sm:$0x2] %vm518, %v590
  %v596 = vsel %vm182, %v590, 0
  %598 = vmatprep.subr.mxu0 0.0
  %599 = vmatpush1.msra.mxu0 0.0
  %600 = vmatprep.subr.mxu0 0.0
  %601 = vmatpush1.msra.mxu0 0.0
  %602 = vmatprep.subr.mxu0 0.0
  %603 = vmatpush1.msra.mxu0 0.0
  %604 = vmatprep.subr.mxu0 0.0
  %605 = vmatpush1.msra.mxu0 0.0
  %606 = vmatprep.subr.mxu0 0.0
  %607 = vmatpush1.msra.mxu0 0.0
  %608 = vmatprep.subr.mxu0 0.0
  %609 = vmatpush1.msra.mxu0 0.0
  %610 = vmatprep.subr.mxu0 0.0
  %611 = vmatpush1.msra.mxu0 0.0
  %612 = vmatprep.subr.mxu0 0.0
  %613 = vmatpush1.msra.mxu0 0.0
  %614 = vmatprep.subr.mxu0 0.0
  %615 = vmatpush1.msra.mxu0 0.0
  %616 = vmatprep.subr.mxu0 0.0
  %617 = vmatpush1.msra.mxu0 0.0
  %618 = vmatprep.subr.mxu0 0.0
  %619 = vmatpush1.msra.mxu0 0.0
  %620 = vmatprep.subr.mxu0 0.0
  %621 = vmatpush1.msra.mxu0 0.0
  %622 = vmatprep.subr.mxu0 0.0
  %623 = vmatpush1.msra.mxu0 %v440
  %624 = vmatprep.subr.mxu0 0.0
  %625 = vmatpush1.msra.mxu0 %v439
  %626 = vmatprep.subr.mxu0 0.0
  %627 = vmatpush1.msra.mxu0 %v438
  %628 = vmatprep.subr.mxu0 0.0
  %629 = vmatpush1.msra.mxu0 %v437
  %630 = vmatprep.subr.mxu0 0.0
  %631 = vmatpush2.msra.mxu0 0.0
  %632 = vmatprep.subr.mxu0 0.0
  %633 = vmatpush2.msra.mxu0 0.0
  %634 = vmatprep.subr.mxu0 0.0
  %635 = vmatpush2.msra.mxu0 0.0
  %636 = vmatprep.subr.mxu0 0.0
  %637 = vmatpush2.msra.mxu0 0.0
  %638 = vmatprep.subr.mxu0 0.0
  %639 = vmatpush2.msra.mxu0 0.0
  %640 = vmatprep.subr.mxu0 0.0
  %641 = vmatpush2.msra.mxu0 0.0
  %642 = vmatprep.subr.mxu0 0.0
  %643 = vmatpush2.msra.mxu0 0.0
  %644 = vmatprep.subr.mxu0 0.0
  %645 = vmatpush2.msra.mxu0 0.0
  %646 = vmatprep.subr.mxu0 0.0
  %647 = vmatpush2.msra.mxu0 0.0
  %648 = vmatprep.subr.mxu0 0.0
  %649 = vmatpush2.msra.mxu0 0.0
  %650 = vmatprep.subr.mxu0 0.0
  %651 = vmatpush2.msra.mxu0 0.0
  %652 = vmatprep.subr.mxu0 0.0
  %653 = vmatpush2.msra.mxu0 0.0
  %654 = vmatprep.subr.mxu0 0.0
  %655 = vmatpush2.msra.mxu0 0.0
  %656 = vmatprep.subr.mxu0 0.0
  %657 = vmatpush2.msra.mxu0 0.0
  %658 = vmatprep.subr.mxu0 0.0
  %659 = vmatpush2.msra.mxu0 0.0
  %660 = vmatprep.subr.mxu0 0.0
  %661 = vmatpush2.msra.mxu0 0.0
  %662 = vmatprep.mubr.f32.mxu0 0.0
  %663 = vmatmul.mubr.f32.gmra.mxu0 %v596
  %v664 = vpop.f32.mrf.mxu0
  %v665 = vadd.f32 0.0, %v664
  %v666 = vpop.f32.mrf.mxu0
  %667 = vdwg.mxu0
  %668 = vst.msk [vmem:[%s9 + $0x2] sm:$0x1] %vm515, %v665
  %669 = vst.msk [vmem:[%s517 + $0x1] sm:$0x2] %vm518, %v665
  %v671 = vsel %vm182, %v665, 0
  %673 = vmatprep.subr.mxu0 0.0
  %674 = vmatpush1.msra.mxu0 0.0
  %675 = vmatprep.subr.mxu0 0.0
  %676 = vmatpush1.msra.mxu0 0.0
  %677 = vmatprep.subr.mxu0 0.0
  %678 = vmatpush1.msra.mxu0 0.0
  %679 = vmatprep.subr.mxu0 0.0
  %680 = vmatpush1.msra.mxu0 0.0
  %681 = vmatprep.subr.mxu0 0.0
  %682 = vmatpush1.msra.mxu0 0.0
  %683 = vmatprep.subr.mxu0 0.0
  %684 = vmatpush1.msra.mxu0 0.0
  %685 = vmatprep.subr.mxu0 0.0
  %686 = vmatpush1.msra.mxu0 0.0
  %687 = vmatprep.subr.mxu0 0.0
  %688 = vmatpush1.msra.mxu0 0.0
  %689 = vmatprep.subr.mxu0 0.0
  %690 = vmatpush1.msra.mxu0 0.0
  %691 = vmatprep.subr.mxu0 0.0
  %692 = vmatpush1.msra.mxu0 0.0
  %693 = vmatprep.subr.mxu0 0.0
  %694 = vmatpush1.msra.mxu0 0.0
  %695 = vmatprep.subr.mxu0 0.0
  %696 = vmatpush1.msra.mxu0 0.0
  %697 = vmatprep.subr.mxu0 0.0
  %698 = vmatpush1.msra.mxu0 %v440
  %699 = vmatprep.subr.mxu0 0.0
  %700 = vmatpush1.msra.mxu0 %v439
  %701 = vmatprep.subr.mxu0 0.0
  %702 = vmatpush1.msra.mxu0 %v438
  %703 = vmatprep.subr.mxu0 0.0
  %704 = vmatpush1.msra.mxu0 %v437
  %705 = vmatprep.subr.mxu0 0.0
  %706 = vmatpush2.msra.mxu0 0.0
  %707 = vmatprep.subr.mxu0 0.0
  %708 = vmatpush2.msra.mxu0 0.0
  %709 = vmatprep.subr.mxu0 0.0
  %710 = vmatpush2.msra.mxu0 0.0
  %711 = vmatprep.subr.mxu0 0.0
  %712 = vmatpush2.msra.mxu0 0.0
  %713 = vmatprep.subr.mxu0 0.0
  %714 = vmatpush2.msra.mxu0 0.0
  %715 = vmatprep.subr.mxu0 0.0
  %716 = vmatpush2.msra.mxu0 0.0
  %717 = vmatprep.subr.mxu0 0.0
  %718 = vmatpush2.msra.mxu0 0.0
  %719 = vmatprep.subr.mxu0 0.0
  %720 = vmatpush2.msra.mxu0 0.0
  %721 = vmatprep.subr.mxu0 0.0
  %722 = vmatpush2.msra.mxu0 0.0
  %723 = vmatprep.subr.mxu0 0.0
  %724 = vmatpush2.msra.mxu0 0.0
  %725 = vmatprep.subr.mxu0 0.0
  %726 = vmatpush2.msra.mxu0 0.0
  %727 = vmatprep.subr.mxu0 0.0
  %728 = vmatpush2.msra.mxu0 0.0
  %729 = vmatprep.subr.mxu0 0.0
  %730 = vmatpush2.msra.mxu0 0.0
  %731 = vmatprep.subr.mxu0 0.0
  %732 = vmatpush2.msra.mxu0 0.0
  %733 = vmatprep.subr.mxu0 0.0
  %734 = vmatpush2.msra.mxu0 0.0
  %735 = vmatprep.subr.mxu0 0.0
  %736 = vmatpush2.msra.mxu0 0.0
  %737 = vmatprep.mubr.f32.mxu0 0.0
  %738 = vmatmul.mubr.f32.gmra.mxu0 %v671
  %v739 = vpop.f32.mrf.mxu0
  %v740 = vadd.f32 0.0, %v739
  %v741 = vpop.f32.mrf.mxu0
  %742 = vdwg.mxu0
  %743 = vst.msk [vmem:[%s9 + $0x3] sm:$0x1] %vm515, %v740
  %744 = vst.msk [vmem:[%s517 + $0x2] sm:$0x2] %vm518, %v740
  %v746 = vsel %vm182, %v740, 0
  %748 = vmatprep.subr.mxu0 0.0
  %749 = vmatpush1.msra.mxu0 0.0
  %750 = vmatprep.subr.mxu0 0.0
  %751 = vmatpush1.msra.mxu0 0.0
  %752 = vmatprep.subr.mxu0 0.0
  %753 = vmatpush1.msra.mxu0 0.0
  %754 = vmatprep.subr.mxu0 0.0
  %755 = vmatpush1.msra.mxu0 0.0
  %756 = vmatprep.subr.mxu0 0.0
  %757 = vmatpush1.msra.mxu0 0.0
  %758 = vmatprep.subr.mxu0 0.0
  %759 = vmatpush1.msra.mxu0 0.0
  %760 = vmatprep.subr.mxu0 0.0
  %761 = vmatpush1.msra.mxu0 0.0
  %762 = vmatprep.subr.mxu0 0.0
  %763 = vmatpush1.msra.mxu0 0.0
  %764 = vmatprep.subr.mxu0 0.0
  %765 = vmatpush1.msra.mxu0 0.0
  %766 = vmatprep.subr.mxu0 0.0
  %767 = vmatpush1.msra.mxu0 0.0
  %768 = vmatprep.subr.mxu0 0.0
  %769 = vmatpush1.msra.mxu0 0.0
  %770 = vmatprep.subr.mxu0 0.0
  %771 = vmatpush1.msra.mxu0 0.0
  %772 = vmatprep.subr.mxu0 0.0
  %773 = vmatpush1.msra.mxu0 %v440
  %774 = vmatprep.subr.mxu0 0.0
  %775 = vmatpush1.msra.mxu0 %v439
  %776 = vmatprep.subr.mxu0 0.0
  %777 = vmatpush1.msra.mxu0 %v438
  %778 = vmatprep.subr.mxu0 0.0
  %779 = vmatpush1.msra.mxu0 %v437
  %780 = vmatprep.subr.mxu0 0.0
  %781 = vmatpush2.msra.mxu0 0.0
  %782 = vmatprep.subr.mxu0 0.0
  %783 = vmatpush2.msra.mxu0 0.0
  %784 = vmatprep.subr.mxu0 0.0
  %785 = vmatpush2.msra.mxu0 0.0
  %786 = vmatprep.subr.mxu0 0.0
  %787 = vmatpush2.msra.mxu0 0.0
  %788 = vmatprep.subr.mxu0 0.0
  %789 = vmatpush2.msra.mxu0 0.0
  %790 = vmatprep.subr.mxu0 0.0
  %791 = vmatpush2.msra.mxu0 0.0
  %792 = vmatprep.subr.mxu0 0.0
  %793 = vmatpush2.msra.mxu0 0.0
  %794 = vmatprep.subr.mxu0 0.0
  %795 = vmatpush2.msra.mxu0 0.0
  %796 = vmatprep.subr.mxu0 0.0
  %797 = vmatpush2.msra.mxu0 0.0
  %798 = vmatprep.subr.mxu0 0.0
  %799 = vmatpush2.msra.mxu0 0.0
  %800 = vmatprep.subr.mxu0 0.0
  %801 = vmatpush2.msra.mxu0 0.0
  %802 = vmatprep.subr.mxu0 0.0
  %803 = vmatpush2.msra.mxu0 0.0
  %804 = vmatprep.subr.mxu0 0.0
  %805 = vmatpush2.msra.mxu0 0.0
  %806 = vmatprep.subr.mxu0 0.0
  %807 = vmatpush2.msra.mxu0 0.0
  %808 = vmatprep.subr.mxu0 0.0
  %809 = vmatpush2.msra.mxu0 0.0
  %810 = vmatprep.subr.mxu0 0.0
  %811 = vmatpush2.msra.mxu0 0.0
  %812 = vmatprep.mubr.f32.mxu0 0.0
  %813 = vmatmul.mubr.f32.gmra.mxu0 %v746
  %v814 = vpop.f32.mrf.mxu0
  %v815 = vadd.f32 0.0, %v814
  %v816 = vpop.f32.mrf.mxu0
  %817 = vdwg.mxu0
  %818 = vst.msk [vmem:[%s9 + $0x4] sm:$0x1] %vm515, %v815
  %819 = vst.msk [vmem:[%s517 + $0x3] sm:$0x2] %vm518, %v815
  // Predicated region
  $region34: #{lren_forward.1} parent=0 // pred_check
    _
  $region35: #{lren_forward.1} parent=0 // pred_check_branch
    %821 = sbr.rel (0) target = $region37
  $region36: #{lren_forward.1} parent=0 // pred_region
    _
  $region37: #{lren_forward.1} parent=0 // pred_fallthru
    _
  // Predicated region
  $region38: #{lren_forward.1} parent=0 // pred_check
    _
  $region39: #{lren_forward.1} parent=0 // pred_check_branch
    %823 = sbr.rel (0) target = $region41
  $region40: #{lren_forward.1} parent=0 // pred_region
    _
  $region41: #{lren_forward.1} parent=0 // pred_fallthru
    _
  // Predicated region
  $region42: #{lren_forward.1} parent=0 // pred_check
    _
  $region43: #{lren_forward.1} parent=0 // pred_check_branch
    %825 = sbr.rel (0) target = $region45
  $region44: #{lren_forward.1} parent=0 // pred_region
    _
  $region45: #{lren_forward.1} parent=0 // pred_fallthru
    _
  // Predicated region
  $region46: #{lren_forward.1} parent=0 // pred_check
    _
  $region47: #{lren_forward.1} parent=0 // pred_check_branch
    %827 = sbr.rel (0) target = $region49
  $region48: #{lren_forward.1} parent=0 // pred_region
    _
  $region49: #{lren_forward.1} parent=0 // pred_fallthru
    _

</llo_original>
